<compile_context>
chip_gen: v5e
topology: v5e:2x2
jax: 0.10.0
libtpu: 0.0.40
codegen_flags: <defaults>
</compile_context>

<pallas_src>
import numpy as np
import jax
import jax.numpy as jnp
from jax.experimental import pallas as pl
from jax.experimental.pallas import tpu as pltpu

SIZES = (1, 2, 3, 6)
LANE = 128
SUBLANE = 8


# ----------------------------------------------------------------------------
# Glue: linear operators for AdaptiveAvgPool2d and bilinear (align_corners) resize
# ----------------------------------------------------------------------------
def _adaptive_pool_matrix(out_size, in_size):
    """Row-stochastic [out_size, in_size] matrix matching nn.AdaptiveAvgPool (1-D)."""
    m = np.zeros((out_size, in_size), dtype=np.float32)
    for i in range(out_size):
        start = (i * in_size) // out_size
        end = -(-((i + 1) * in_size) // out_size)  # ceil
        m[i, start:end] = 1.0 / (end - start)
    return m


def _bilinear_matrix(out_size, in_size):
    """[out_size, in_size] bilinear interpolation matrix, align_corners=True (1-D)."""
    m = np.zeros((out_size, in_size), dtype=np.float32)
    if in_size == 1:
        m[:, 0] = 1.0
        return m
    scale = (in_size - 1) / (out_size - 1) if out_size > 1 else 0.0
    for o in range(out_size):
        src = o * scale
        i0 = min(int(np.floor(src)), in_size - 1)
        i1 = min(i0 + 1, in_size - 1)
        frac = src - i0
        m[o, i0] += 1.0 - frac
        m[o, i1] += frac
    return m


# ----------------------------------------------------------------------------
# Pass 1: pooled^T[C, R] += x[C, tile_hw] @ P^T[tile_hw, R]   (pure f32 reduction)
# ----------------------------------------------------------------------------
def _spsp_pool_kernel(x_ref, pT_ref, pooled_ref, acc_ref):
    # x_ref:      [1, C, tile_hw]    f32   (NCHW slab, streamed as-is)
    # pT_ref:     [tile_hw, R_pad]   f32   (transposed concatenated pool operator)
    # pooled_ref: [1, 1, C, R_pad]   f32   (partial pooled output for this split/batch)
    # acc_ref:    [C, R_pad]         f32   (VMEM scratch accumulator)
    t = pl.program_id(2)

    @pl.when(t == 0)
    def _():
        acc_ref[...] = jnp.zeros_like(acc_ref)

    acc_ref[...] += jnp.dot(x_ref[0], pT_ref[...],
                            preferred_element_type=jnp.float32)

    @pl.when(t == pl.num_programs(2) - 1)
    def _():
        pooled_ref[0, 0] = acc_ref[...]


# ----------------------------------------------------------------------------
# Pass 2 (transposed): out^T[F, tile] = Wx^T @ x + Y^T @ U^T + bias ; ReLU ; bf16 store
# ----------------------------------------------------------------------------
def _spsp_output_kernel(x_ref, uT_ref, wxT_ref, yT_ref, bias_ref, o_ref):
    # x_ref:    [1, C, tile_hw]     f32   (cast to bf16 in-kernel for the MXU)
    # uT_ref:   [R_pad, tile_hw]    bf16  (transposed concatenated upsample operator)
    # wxT_ref:  [F_pad, C]          bf16  (folded down-path weight, transposed)
    # yT_ref:   [1, F_pad, R_pad]   bf16  (stage-weighted pooled features, transposed)
    # bias_ref: [F_pad, 1]          f32   (folded bias)
    # o_ref:    [1, F_pad, tile_hw] bf16
    x_bf = x_ref[0].astype(jnp.bfloat16)
    acc = jnp.dot(wxT_ref[...], x_bf, preferred_element_type=jnp.float32)
    acc = acc + jnp.dot(yT_ref[0], uT_ref[...], preferred_element_type=jnp.float32)
    acc = acc + bias_ref[...]
    # Dropout2d(0.1) is the identity in eval mode.
    o_ref[0] = jnp.maximum(acc, 0.0).astype(o_ref.dtype)


# ----------------------------------------------------------------------------
# Helpers: VMEM sizing / capacity, tile selection, single-buffered constant specs
# ----------------------------------------------------------------------------
def _block_bytes(shape, dtype):
    itemsize = np.dtype(dtype).itemsize
    dims = list(shape)
    dims[-1] = -(-dims[-1] // LANE) * LANE
    if len(dims) >= 2:
        dims[-2] = -(-dims[-2] // SUBLANE) * SUBLANE
    n = 1
    for d in dims:
        n *= int(d)
    return n * itemsize


def _vmem_cap_bytes():
    """Usable scoped-VMEM budget: physical per-core capacity minus compiler headroom."""
    cap = 64 << 20  # conservative default (v7x per-TensorCore VMEM)
    try:
        info = pltpu.get_tpu_info()
        cap = int(getattr(info, "vmem_capacity_bytes", cap))
    except Exception:
        pass
    return int(cap * 0.78)  # leave room for internal scratch / semaphores


def _round_down_lane(v):
    return max(LANE, (int(v) // LANE) * LANE)


def _pick_hw_tile(hw, target):
    """Largest multiple of 128 <= target that divides hw (full hw if hw <= target).
    Falls back to target itself (=> spatial padding) if hw has no suitable divisor."""
    if hw <= target:
        return hw
    d = (target // LANE) * LANE
    while d >= LANE:
        if hw % d == 0:
            return d
        d -= LANE
    return (target // LANE) * LANE


def _const_spec(shape, index_map):
    """BlockSpec for a grid-invariant operand: request single buffering if supported."""
    try:
        return pl.BlockSpec(shape, index_map, pipeline_mode=pl.Buffered(1))
    except Exception:
        return pl.BlockSpec(shape, index_map)


# ----------------------------------------------------------------------------
# Wrapper
# ----------------------------------------------------------------------------
def spsp_forward(x_nchw, params, *, out_dtype=jnp.bfloat16):
    N, C, H, W = x_nchw.shape
    HW = H * W
    F = params["out_features"]
    F_pad = params["F_pad"]
    R_pad = params["R_pad"]
    wxT = params["wx_eff_t"]          # [F_pad, C]  bf16
    w_stage = params["w_stage_eff"]   # [S, C, F_pad] f32 (used only in the tiny XLA einsum)
    mask = params["stage_mask"]       # [S, R_pad] f32
    bias = params["bias_eff"]         # [F_pad, 1] f32

    # x streamed in its native NCHW layout (flattened spatial), f32, no transpose/cast pass.
    x = x_nchw.reshape(N, C, HW)
    if x.dtype != jnp.float32:
        x = x.astype(jnp.float32)

    # ---- budget-driven, per-pass tile selection ----
    cap = _vmem_cap_bytes()
    budget = max(cap - (24 << 20), 8 << 20)
    col1 = 2 * (4 * C + 4 * LANE)                       # per hw column, pass 1 (double-buffered)
    col2 = 2 * (4 * C + 2 * R_pad + 2 * F_pad)          # per hw column, pass 2 (double-buffered)
    fixed1 = (2 * _block_bytes((1, 1, C, R_pad), jnp.float32)
              + _block_bytes((C, R_pad), jnp.float32))
    fixed2 = (_block_bytes((F_pad, C), jnp.bfloat16)
              + 2 * _block_bytes((1, F_pad, R_pad), jnp.bfloat16)
              + _block_bytes((F_pad, 1), jnp.float32))
    target1 = min(4096, max(256, _round_down_lane((budget - fixed1) // col1)))
    target2 = min(2048, max(256, _round_down_lane((budget - fixed2) // col2)))

    tile2 = _pick_hw_tile(HW, target2)
    hw_pad = -(-HW // tile2) * tile2
    n2 = hw_pad // tile2
    # pass-1 tile = a multiple of tile2 that divides hw_pad (larger tiles: pass 1 is a pure stream)
    m = 1
    for k in range(1, n2 + 1):
        if n2 % k == 0 and tile2 * k <= max(target1, tile2):
            m = k
    tile1 = tile2 * m
    n1 = n2 // m

    if hw_pad > HW:
        x = jnp.pad(x, ((0, 0), (0, 0), (0, hw_pad - HW)))
        p_t = jnp.pad(params["p_all_t"], ((0, hw_pad - HW), (0, 0)))
        u_t = jnp.pad(params["u_all_t"], ((0, 0), (0, hw_pad - HW)))
    else:
        p_t = params["p_all_t"]
        u_t = params["u_all_t"]

    # Split the pass-1 HW reduction into two partial accumulators (keeps both v7x TCs busy
    # at batch 1); on single-TC chips this is just two short sequential reductions.
    n_splits = 2 if (n1 % 2 == 0 and n1 >= 2) else 1
    tps = n1 // n_splits

    needed1 = (2 * _block_bytes((1, C, tile1), jnp.float32)
               + 2 * _block_bytes((tile1, R_pad), jnp.float32)
               + fixed1)
    needed2 = (2 * _block_bytes((1, C, tile2), jnp.float32)
               + 2 * _block_bytes((R_pad, tile2), jnp.bfloat16)
               + 2 * _block_bytes((1, F_pad, tile2), jnp.bfloat16)
               + fixed2)
    vmem1 = int(max(needed1 + (8 << 20), min(cap, needed1 + (16 << 20))))
    vmem2 = int(max(needed2 + (8 << 20), min(cap, needed2 + (16 << 20))))

    # -------- pass 1: pyramid pooling reduction over HW tiles (f32) --------
    pooled_parts = pl.pallas_call(
        _spsp_pool_kernel,
        out_shape=jax.ShapeDtypeStruct((n_splits, N, C, R_pad), jnp.float32),
        grid_spec=pltpu.PrefetchScalarGridSpec(
            num_scalar_prefetch=0,
            grid=(n_splits, N, tps),
            in_specs=[
                pl.BlockSpec((1, C, tile1), lambda s, n, t: (n, 0, s * tps + t)),
                pl.BlockSpec((tile1, R_pad), lambda s, n, t: (s * tps + t, 0)),
            ],
            out_specs=pl.BlockSpec((1, 1, C, R_pad), lambda s, n, t: (s, n, 0, 0)),
            scratch_shapes=[pltpu.VMEM((C, R_pad), jnp.float32)],
        ),
        compiler_params=pltpu.CompilerParams(
            dimension_semantics=("parallel", "parallel", "arbitrary"),
            vmem_limit_bytes=vmem1),
    )(x, p_t)

    pooled = pooled_parts[0] if n_splits == 1 else jnp.sum(pooled_parts, axis=0)  # [N, C, R_pad]

    # Tiny stage-weighted matmul (M = 50 pooled rows) done in plain XLA, f32:
    #   Y^T[n, f, r] = sum_s mask[s, r] * sum_c pooled[n, c, r] * W_s[c, f]
    y_t = jnp.einsum('ncr,scf,sr->nfr', pooled, w_stage, mask,
                     precision=jax.lax.Precision.HIGHEST).astype(jnp.bfloat16)

    # -------- pass 2: per-tile output, written directly in NCHW layout --------
    out = pl.pallas_call(
        _spsp_output_kernel,
        out_shape=jax.ShapeDtypeStruct((N, F_pad, hw_pad), out_dtype),
        grid_spec=pltpu.PrefetchScalarGridSpec(
            num_scalar_prefetch=0,
            grid=(N, n2),
            in_specs=[
                pl.BlockSpec((1, C, tile2), lambda n, t: (n, 0, t)),
                pl.BlockSpec((R_pad, tile2), lambda n, t: (0, t)),
                _const_spec((F_pad, C), lambda n, t: (0, 0)),
                pl.BlockSpec((1, F_pad, R_pad), lambda n, t: (n, 0, 0)),
                _const_spec((F_pad, 1), lambda n, t: (0, 0)),
            ],
            out_specs=pl.BlockSpec((1, F_pad, tile2), lambda n, t: (n, 0, t)),
        ),
        compiler_params=pltpu.CompilerParams(
            dimension_semantics=("parallel", "parallel"),
            vmem_limit_bytes=vmem2),
    )(x, u_t, wxT, y_t, bias)

    if F_pad != F or hw_pad != HW:
        out = out[:, :F, :HW]
    return out.reshape(N, F, H, W)   # already NCHW: no transpose


# ----------------------------------------------------------------------------
# Raw (PyTorch-equivalent) parameters and offline folding
# ----------------------------------------------------------------------------
def make_params(key, C, H, W, out_features=8, eps=1e-5):
    """Raw SPSPModule parameters (eval mode): per-stage conv+BN, down conv+BN, bottleneck conv+BN."""
    F = out_features
    keys = iter(jax.random.split(key, 64))

    def conv_w(c_in, c_out):
        # torch Conv2d(c_in, c_out, 1, bias=False) weight [c_out, c_in, 1, 1] stored as [c_in, c_out].
        return jax.random.normal(next(keys), (c_in, c_out), jnp.float32) / np.sqrt(c_in)

    def bn(n):
        return dict(
            gamma=1.0 + 0.1 * jax.random.normal(next(keys), (n,), jnp.float32),
            beta=0.1 * jax.random.normal(next(keys), (n,), jnp.float32),
            mean=0.1 * jax.random.normal(next(keys), (n,), jnp.float32),
            var=1.0 + 0.1 * jax.random.uniform(next(keys), (n,), jnp.float32),
            eps=eps)

    return dict(
        features=C, out_features=F, H=H, W=W,
        stage_w=[conv_w(C, F) for _ in SIZES],
        stage_bn=[bn(F) for _ in SIZES],
        down_w=conv_w(C, F), down_bn=bn(F),
        bottleneck_w=conv_w(F, F), bottleneck_bn=bn(F),
    )


def fold_params(raw):
    """Fold BNs + bottleneck conv into effective weights (transposed layouts), one bias,
    and build the transposed pyramid pool / upsample operators P^T, U^T."""
    C, F, H, W = raw["features"], raw["out_features"], raw["H"], raw["W"]
    HW = H * W
    F_pad = -(-F // SUBLANE) * SUBLANE          # F lives on the sublane axis now: pad to x8 only
    R = sum(s * s for s in SIZES)
    R_pad = -(-R // SUBLANE) * SUBLANE
    S = len(SIZES)

    def bn_scale_shift(bn):
        scale = bn["gamma"] / jnp.sqrt(bn["var"] + bn["eps"])
        return scale, bn["beta"] - bn["mean"] * scale

    b_scale, b_shift = bn_scale_shift(raw["bottleneck_bn"])
    wb = raw["bottleneck_w"] * b_scale[None, :]              # bottleneck conv with BN_b folded in

    d_scale, d_shift = bn_scale_shift(raw["down_bn"])
    wx_eff = (raw["down_w"] * d_scale[None, :]) @ wb         # [C, F]

    shift_sum = d_shift
    w_stage_eff = []
    for i, _ in enumerate(SIZES):
        s_scale, s_shift = bn_scale_shift(raw["stage_bn"][i])
        w_stage_eff.append((raw["stage_w"][i] * s_scale[None, :]) @ wb)   # [C, F]
        shift_sum = shift_sum + s_shift
    # Per-channel shifts pass unchanged through align_corners bilinear upsampling
    # (rows sum to 1), so they fold into one bias through the bottleneck.
    bias_eff = shift_sum @ wb + b_shift                      # [F]

    def pad_f_last(a):
        return jnp.pad(a, [(0, 0)] * (a.ndim - 1) + [(0, F_pad - F)])

    wx_eff_t = jnp.transpose(pad_f_last(wx_eff))                         # [F_pad, C]
    w_stage_eff = jnp.stack([pad_f_last(w) for w in w_stage_eff], 0)     # [S, C, F_pad] (f32)
    bias_eff = pad_f_last(bias_eff).reshape(F_pad, 1)

    # Concatenated (transposed) pyramid pool / upsample operators, zero-padded to R_pad.
    p_all_t = np.zeros((HW, R_pad), np.float32)
    u_all_t = np.zeros((R_pad, HW), np.float32)
    mask = np.zeros((S, R_pad), np.float32)
    r = 0
    for i, s in enumerate(SIZES):
        ph, pw = _adaptive_pool_matrix(s, H), _adaptive_pool_matrix(s, W)
        uh, uw = _bilinear_matrix(H, s), _bilinear_matrix(W, s)
        P = np.einsum('ah,bw->abhw', ph, pw).reshape(s * s, HW)
        U = np.einsum('ha,wb->hwab', uh, uw).reshape(HW, s * s)
        p_all_t[:, r:r + s * s] = P.T
        u_all_t[r:r + s * s, :] = U.T
        mask[i, r:r + s * s] = 1.0
        r += s * s

    return dict(
        out_features=F, F_pad=F_pad, R_pad=R_pad,
        wx_eff_t=wx_eff_t.astype(jnp.bfloat16),
        w_stage_eff=w_stage_eff.astype(jnp.float32),
        bias_eff=bias_eff.astype(jnp.float32),
        p_all_t=jnp.asarray(p_all_t, jnp.float32),      # f32 pooling coefficients (accuracy)
        u_all_t=jnp.asarray(u_all_t, jnp.bfloat16),
        stage_mask=jnp.asarray(mask, jnp.float32),
    )


# ----------------------------------------------------------------------------
# Plain-JAX reference in the original (un-folded) form, f32, for correctness
# ----------------------------------------------------------------------------
def spsp_reference(x_nchw, raw):
    N, C, H, W = x_nchw.shape
    F = raw["out_features"]
    HW = H * W
    hi = jax.lax.Precision.HIGHEST
    x = jnp.transpose(x_nchw, (0, 2, 3, 1)).reshape(N, HW, C)

    def bn_apply(y, bn):
        scale = bn["gamma"] / jnp.sqrt(bn["var"] + bn["eps"])
        return y * scale + (bn["beta"] - bn["mean"] * scale)

    sum_feat = bn_apply(jnp.einsum('nhc,cf->nhf', x, raw["down_w"], precision=hi),
                        raw["down_bn"])
    for i, s in enumerate(SIZES):
        ph, pw = _adaptive_pool_matrix(s, H), _adaptive_pool_matrix(s, W)
        uh, uw = _bilinear_matrix(H, s), _bilinear_matrix(W, s)
        p = jnp.asarray(np.einsum('ah,bw->abhw', ph, pw).reshape(s * s, HW))
        u = jnp.asarray(np.einsum('ha,wb->hwab', uh, uw).reshape(HW, s * s))
        pooled = jnp.einsum('ph,nhc->npc', p, x, precision=hi)
        y = bn_apply(jnp.einsum('npc,cf->npf', pooled, raw["stage_w"][i], precision=hi),
                     raw["stage_bn"][i])
        sum_feat = sum_feat + jnp.einsum('hp,npf->nhf', u, y, precision=hi)
    bottle = bn_apply(jnp.einsum('nhf,fg->nhg', sum_feat, raw["bottleneck_w"], precision=hi),
                      raw["bottleneck_bn"])
    bottle = jnp.maximum(bottle, 0.0)        # Dropout2d: identity in eval
    return jnp.transpose(bottle.reshape(N, H, W, F), (0, 3, 1, 2))


if __name__ == "__main__":
    key = jax.random.PRNGKey(0)
    kx, kp = jax.random.split(key)

    N, C, H, W = 2, 4, 16, 16      # small test shapes (features=C)
    F = 8                          # out_features (small synthetic value)

    x = jax.random.normal(kx, (N, C, H, W), jnp.float32)
    raw = make_params(kp, C, H, W, out_features=F)
    params = fold_params(raw)

    out = jax.block_until_ready(spsp_forward(x, params))
    assert out.shape == (N, F, H, W), out.shape

    ref = spsp_reference(x, raw)
    # bf16 weights / bf16 output (f32 accumulation) in the kernel path -> loosened tolerance.
    out_f32 = np.asarray(out.astype(jnp.float32))
    np.testing.assert_allclose(out_f32, np.asarray(ref), rtol=5e-2, atol=8e-2)
    print("KERNEL_OK")
</pallas_src>

<mosaic_0001>
module attributes {stable_mosaic.version = 11 : i64} {
  func.func @_spsp_pool_kernel(%arg0: i32, %arg1: i32, %arg2: i32, %arg3: memref<1x4x256xf32, #tpu.memory_space<vmem>>, %arg4: memref<256x56xf32, #tpu.memory_space<vmem>>, %arg5: memref<1x1x4x56xf32, #tpu.memory_space<vmem>>, %arg6: memref<4x56xf32, #tpu.memory_space<vmem>>) attributes {dimension_semantics = [#tpu.dimension_semantics<parallel>, #tpu.dimension_semantics<parallel>, #tpu.dimension_semantics<arbitrary>], iteration_bounds = array<i64: 1, 2, 1>, scalar_prefetch = 0 : i64, scratch_operands = 1 : i64, tpu.core_type = #tpu.core_type<tc>, window_params = [{transform_indices = @transform_0, window_bounds = array<i64: 1, 4, 256>}, {transform_indices = @transform_1, window_bounds = array<i64: 256, 56>}, {transform_indices = @transform_2, window_bounds = array<i64: 1, 1, 4, 56>}]} {
    %c0_i32 = arith.constant 0 : i32
    %0 = arith.cmpi eq, %arg2, %c0_i32 : i32
    %1 = arith.extui %0 : i1 to i32
    %c0_i32_0 = arith.constant 0 : i32
    %2 = arith.cmpi ne, %1, %c0_i32_0 : i32
    scf.if %2 {
      %cst_11 = arith.constant 0.000000e+00 : f32
      %13 = vector.broadcast %cst_11 : f32 to vector<4x56xf32>
      %c0_12 = arith.constant 0 : index
      %c0_13 = arith.constant 0 : index
      %14 = vector.load %arg6[%c0_12, %c0_13] : memref<4x56xf32, #tpu.memory_space<vmem>>, vector<4x56xf32>
      tpu.vector_store %arg6[%c0_12, %c0_13], %13 {strides = array<i32>} : memref<4x56xf32, #tpu.memory_space<vmem>>, vector<4x56xf32>,
    } else {
    }
    %c0 = arith.constant 0 : index
    %c0_1 = arith.constant 0 : index
    %3 = vector.load %arg6[%c0, %c0_1] : memref<4x56xf32, #tpu.memory_space<vmem>>, vector<4x56xf32>
    %c0_2 = arith.constant 0 : index
    %c0_3 = arith.constant 0 : index
    %c0_4 = arith.constant 0 : index
    %4 = vector.load %arg3[%c0_2, %c0_3, %c0_4] : memref<1x4x256xf32, #tpu.memory_space<vmem>>, vector<1x4x256xf32>
    %5 = vector.shape_cast %4 : vector<1x4x256xf32> to vector<4x256xf32>
    %c0_5 = arith.constant 0 : index
    %c0_6 = arith.constant 0 : index
    %6 = vector.load %arg4[%c0_5, %c0_6] : memref<256x56xf32, #tpu.memory_space<vmem>>, vector<256x56xf32>
    %cst = arith.constant dense<0.000000e+00> : vector<4x56xf32>
    %7 = tpu.matmul %5, %6, %cst {dimension_numbers = #tpu.dot_dimension_numbers<[1], [0], [0], [1], [0, 0, 1, 1], [], []>} : vector<4x256xf32>, vector<256x56xf32>, vector<4x56xf32> -> vector<4x56xf32>
    %8 = arith.addf %3, %7 : vector<4x56xf32>
    %c0_7 = arith.constant 0 : index
    %c0_8 = arith.constant 0 : index
    %9 = vector.load %arg6[%c0_7, %c0_8] : memref<4x56xf32, #tpu.memory_space<vmem>>, vector<4x56xf32>
    tpu.vector_store %arg6[%c0_7, %c0_8], %8 {strides = array<i32>} : memref<4x56xf32, #tpu.memory_space<vmem>>, vector<4x56xf32>,
    %c0_i32_9 = arith.constant 0 : i32
    %10 = arith.cmpi eq, %arg2, %c0_i32_9 : i32
    %11 = arith.extui %10 : i1 to i32
    %c0_i32_10 = arith.constant 0 : i32
    %12 = arith.cmpi ne, %11, %c0_i32_10 : i32
    scf.if %12 {
      %c0_11 = arith.constant 0 : index
      %c0_12 = arith.constant 0 : index
      %13 = vector.load %arg6[%c0_11, %c0_12] : memref<4x56xf32, #tpu.memory_space<vmem>>, vector<4x56xf32>
      %c0_13 = arith.constant 0 : index
      %c0_14 = arith.constant 0 : index
      %c0_15 = arith.constant 0 : index
      %c0_16 = arith.constant 0 : index
      %14 = vector.load %arg5[%c0_13, %c0_14, %c0_15, %c0_16] : memref<1x1x4x56xf32, #tpu.memory_space<vmem>>, vector<1x1x4x56xf32>
      %15 = vector.shape_cast %14 : vector<1x1x4x56xf32> to vector<4x56xf32>
      %16 = vector.shape_cast %13 : vector<4x56xf32> to vector<1x1x4x56xf32>
      tpu.vector_store %arg5[%c0_13, %c0_14, %c0_15, %c0_16], %16 {strides = array<i32>} : memref<1x1x4x56xf32, #tpu.memory_space<vmem>>, vector<1x1x4x56xf32>,
    } else {
    }
    return
  }
  func.func @transform_0(%arg0: i32, %arg1: i32, %arg2: i32) -> (i32, i32, i32) {
    %c1_i32 = arith.constant 1 : i32
    %0 = arith.muli %arg0, %c1_i32 : i32
    %1 = arith.addi %0, %arg2 : i32
    %c0_i32 = arith.constant 0 : i32
    %c0_i32_0 = arith.constant 0 : i32
    return %arg1, %c0_i32, %1 : i32, i32, i32
  }
  func.func @transform_1(%arg0: i32, %arg1: i32, %arg2: i32) -> (i32, i32) {
    %c1_i32 = arith.constant 1 : i32
    %0 = arith.muli %arg0, %c1_i32 : i32
    %1 = arith.addi %0, %arg2 : i32
    %c0_i32 = arith.constant 0 : i32
    %c0_i32_0 = arith.constant 0 : i32
    return %1, %c0_i32 : i32, i32
  }
  func.func @transform_2(%arg0: i32, %arg1: i32, %arg2: i32) -> (i32, i32, i32, i32) {
    %c0_i32 = arith.constant 0 : i32
    %c0_i32_0 = arith.constant 0 : i32
    %c0_i32_1 = arith.constant 0 : i32
    return %arg0, %arg1, %c0_i32, %c0_i32_0 : i32, i32, i32, i32
  }
}

</mosaic_0001>

<llo_original>
// kernel: tpu_custom_call.1
$region0: #{tpu_custom_call.1}
  #allocation0 [shape = 'u32[]', space=smem, size = 0x4, offset = 0x4, fixed_abs, tag = 'smem constant byte address 0x4 - core index']
  #allocation1 [shape = 'u32[72,128]{1,0:T(1,128)}', space=vmem, size = 0x9000, scoped, tag = 'internal scratch']
  #allocation2 [shape = 'f32[4,56]{1,0:T(4,128)}', space=vmem, size = 0x800, scoped, tag = 'scratch operand']
  %s0 = inlined_call_operand.vmem [shape: f32[2,4,256], index: 0, kind: input, shape index: {}]
  %s1 = inlined_call_operand.vmem [shape: f32[256,56], index: 1, kind: input, shape index: {}]
  %s2 = inlined_call_operand.hbm [shape: f32[1,2,4,56], index: 2, kind: output, shape index: {}]
  %s3 = sld [smem:[#allocation0]]
  $region49: #{tpu_custom_call.1} parent=0
    _
  %s5 = ssub.s32 1, %s3
  %s6 = scalar_select 0, %s5, %s3
  $region1: #{tpu_custom_call.1} parent=0
    #allocation3 [shape = 'u8[4096]{0}', space=vmem, size = 0x1000, scoped, tag = 'output window, operand 0']
    #allocation4 [shape = 's32[2]{0}', space=sflag, size = 0x8, scoped, tag = 'scoped memory for tpu_custom_call.1']
    %7 = vsyncpa [#allocation4], 0
    %s8 = scalar_lea.sflag [#allocation4], 1
    %9 = vsyncpa %s8, 0
    loop: start=0, step=1, limit=4
    $region2: #{tpu_custom_call.1} parent=1 // loop_pre_header
      _
    $region3: #{tpu_custom_call.1} parent=1 // loop_header
      %s11 = sphi 0, %s15
      %p12 = scmp.ge.s32.totalorder %s11, 4
      %s18 = sphi 0, %s37
      %s19 = sphi 0, %s33
      %s20 = sphi 0, %s29
      %s21 = sphi 0, %s18
      %s22 = sphi 0, %s19
      %s23 = sphi 0, %s20
      %s24 = sphi 0, %s21
      %s25 = sphi 0, %s22
      %s26 = sphi 0, %s23
      %s44 = sphi 0, %s46
      %s47 = sphi 0, %s44
      %s48 = sphi 0, %s47
      %s64 = sphi 0, %s48
      %s72 = sphi 0, %s74
      %s75 = sphi 0, %s72
      %s76 = sphi 0, %s75
      %s92 = sphi 0, %s76
      %s100 = sphi 0, %s102
      %s103 = sphi 0, %s100
      %s104 = sphi 0, %s103
      %s120 = sphi 0, %s104
    $region4: #{tpu_custom_call.1} parent=1 // loop_header_branch
      %14 = sbr.rel (%p12) target = $region8
    $region5: #{tpu_custom_call.1} parent=1 // loop_body
      %s16 = ssub.s32 %s11, 1
      %s17 = ssub.s32 %s11, 2
      %s27 = sadd.s32 1, %s20
      %p28 = scmp.ge.s32.totalorder %s27, 1
      %s29 = scalar_select %p28, 0, %s27
      %s30 = sadd.s32 1, %s19
      %s31 = scalar_select %p28, %s30, %s19
      %p32 = scmp.ge.s32.totalorder %s31, 2
      %s33 = scalar_select %p32, 0, %s31
      %s34 = sadd.s32 1, %s18
      %s35 = scalar_select %p32, %s34, %s18
      %p36 = scmp.ge.s32.totalorder %s35, 1
      %s37 = scalar_select %p36, 0, %s35
      %s38 = sadd.s32 %s18, %s20
      %s39 = sadd.s32 %s37, %s29
      %s40 = ssub.s32 %s19, %s33
      %s41 = ssub.s32 %s38, %s39
      %s42 = sor.u32 %s40, %s41
      %p43 = scmp.eq.s32.totalorder %s42, 0
      %s45 = sadd.s32 %s44, 1
      %s46 = scalar_select %p43, %s44, %s45
      %p49 = pneg %p43
      %p50 = scmp.eq.s32.totalorder %s11, 1
      %p51 = por %p49, %p50
      %p52 = scmp.ne.s32.totalorder %s44, %s47
      %p53 = scmp.eq.s32.totalorder %s11, 0
      %p54 = por %p52, %p53
      %p55 = scmp.ne.s32.totalorder %s44, %s47
      %p56 = scmp.eq.s32.totalorder %s16, 1
      %p57 = por %p55, %p56
      %p58 = scmp.ne.s32.totalorder %s47, %s48
      %p59 = scmp.eq.s32.totalorder %s16, 0
      %p60 = por %p58, %p59
      %p61 = scmp.ne.s32.totalorder %s47, %s48
      %p62 = scmp.eq.s32.totalorder %s17, 1
      %p63 = por %p61, %p62
      %p65 = scmp.ne.s32.totalorder %s48, %s64
      %p66 = scmp.eq.s32.totalorder %s17, 0
      %p67 = por %p65, %p66
      %s68 = sadd.s32 %s18, %s20
      %s69 = sadd.s32 %s37, %s29
      %s70 = ssub.s32 %s68, %s69
      %p71 = scmp.eq.s32.totalorder %s70, 0
      %s73 = sadd.s32 %s72, 1
      %s74 = scalar_select %p71, %s72, %s73
      %p77 = pneg %p71
      %p78 = scmp.eq.s32.totalorder %s11, 1
      %p79 = por %p77, %p78
      %p80 = scmp.ne.s32.totalorder %s72, %s75
      %p81 = scmp.eq.s32.totalorder %s11, 0
      %p82 = por %p80, %p81
      %p83 = scmp.ne.s32.totalorder %s72, %s75
      %p84 = scmp.eq.s32.totalorder %s16, 1
      %p85 = por %p83, %p84
      %p86 = scmp.ne.s32.totalorder %s75, %s76
      %p87 = scmp.eq.s32.totalorder %s16, 0
      %p88 = por %p86, %p87
      %p89 = scmp.ne.s32.totalorder %s75, %s76
      %p90 = scmp.eq.s32.totalorder %s17, 1
      %p91 = por %p89, %p90
      %p93 = scmp.ne.s32.totalorder %s76, %s92
      %p94 = scmp.eq.s32.totalorder %s17, 0
      %p95 = por %p93, %p94
      %s96 = ssub.s32 %s18, %s37
      %s97 = ssub.s32 %s19, %s33
      %s98 = sor.u32 %s96, %s97
      %p99 = scmp.eq.s32.totalorder %s98, 0
      %s101 = sadd.s32 %s100, 1
      %s102 = scalar_select %p99, %s100, %s101
      %p105 = pneg %p99
      %p106 = scmp.eq.s32.totalorder %s11, 1
      %p107 = por %p105, %p106
      %p108 = scmp.ne.s32.totalorder %s100, %s103
      %p109 = scmp.eq.s32.totalorder %s11, 0
      %p110 = por %p108, %p109
      %p111 = scmp.ne.s32.totalorder %s100, %s103
      %p112 = scmp.eq.s32.totalorder %s16, 1
      %p113 = por %p111, %p112
      %p114 = scmp.ne.s32.totalorder %s103, %s104
      %p115 = scmp.eq.s32.totalorder %s16, 0
      %p116 = por %p114, %p115
      %p117 = scmp.ne.s32.totalorder %s103, %s104
      %p118 = scmp.eq.s32.totalorder %s17, 1
      %p119 = por %p117, %p118
      %p121 = scmp.ne.s32.totalorder %s104, %s120
      %p122 = scmp.eq.s32.totalorder %s17, 0
      %p123 = por %p121, %p122
      %p124 = scmp.le.s32.totalorder 1, %s11
      %p125 = scmp.lt.s32.totalorder %s11, 3
      %p126 = pnand %p124, %p125
      %p127 = pneg %p126
      // Predicated region
      $region9: #{tpu_custom_call.1} parent=5 // pred_check
        _
      $region10: #{tpu_custom_call.1} parent=5 // pred_check_branch
        %129 = sbr.rel (%p126) target = $region12
      $region11: #{tpu_custom_call.1} parent=5 // pred_region
        %s130 = ssub.s32 %s11, 1
        // Predicated region
        $region13: #{tpu_custom_call.1} parent=11 // pred_check
          %p131 = pneg %p88
        $region14: #{tpu_custom_call.1} parent=11 // pred_check_branch
          %133 = sbr.rel (%p131) target = $region16
        $region15: #{tpu_custom_call.1} parent=11 // pred_region
          %s134 = sadd.s32 %s21, %s23
          %s135 = smul.u32 32, %s134
          %p136 = scmp.lt.s32.totalorder %s135, 31
          %s137 = scalar_select %p136, %s135, 31
          %s138 = smul.addr %s137, 8
          %s139 = scalar_lea.vmem %s1, %s138
          %s140 = sadd.s32 %s21, %s23
          %s141 = smul.u32 32, %s140
        $region16: #{tpu_custom_call.1} parent=11 // pred_fallthru
          _
      $region12: #{tpu_custom_call.1} parent=5 // pred_fallthru
        _
      %p142 = scmp.lt.s32.totalorder %s11, 2
      // Predicated region
      $region17: #{tpu_custom_call.1} parent=5 // pred_check
        %p143 = pneg %p142
      $region18: #{tpu_custom_call.1} parent=5 // pred_check_branch
        %145 = sbr.rel (%p143) target = $region20
      $region19: #{tpu_custom_call.1} parent=5 // pred_region
        // Predicated region
        $region21: #{tpu_custom_call.1} parent=19 // pred_check
          %p146 = pneg %p54
        $region22: #{tpu_custom_call.1} parent=19 // pred_check_branch
          %148 = sbr.rel (%p146) target = $region24
        $region23: #{tpu_custom_call.1} parent=19 // pred_region
          %s149 = sadd.s32 %s18, %s20
          %s150 = smul.u32 2, %s149
          %p151 = scmp.lt.s32.totalorder %s19, 1
          %s152 = scalar_select %p151, %s19, 1
          %p153 = scmp.lt.s32.totalorder %s150, 1
          %s154 = scalar_select %p153, %s150, 1
          %s155 = smul.addr %s152, 2
          %s156 = sadd.s32 %s154, %s155
          %s157 = smul.addr %s156, 4
          %s158 = scalar_lea.vmem %s0, %s157
          %s159 = sadd.s32 %s18, %s20
          %s160 = smul.u32 2, %s159
        $region24: #{tpu_custom_call.1} parent=19 // pred_fallthru
          _
      $region20: #{tpu_custom_call.1} parent=5 // pred_fallthru
        _
      %p161 = scmp.le.s32.totalorder 1, %s11
      %p162 = scmp.lt.s32.totalorder %s11, 3
      %p163 = pnand %p161, %p162
      %p164 = pneg %p163
      // Predicated region
      $region25: #{tpu_custom_call.1} parent=5 // pred_check
        _
      $region26: #{tpu_custom_call.1} parent=5 // pred_check_branch
        %166 = sbr.rel (%p163) target = $region28
      $region27: #{tpu_custom_call.1} parent=5 // pred_region
        %s167 = ssub.s32 %s11, 1
        %s168 = sadd.s32 %s21, %s23
        %s169 = smul.u32 2, %s168
        %p170 = scmp.lt.s32.totalorder %s22, 1
        %s171 = scalar_select %p170, %s22, 1
        %p172 = scmp.lt.s32.totalorder %s169, 1
        %s173 = scalar_select %p172, %s169, 1
        %s174 = smul.addr %s171, 2
        %s175 = sadd.s32 %s173, %s174
        %s176 = smul.addr %s175, 4
        %s177 = scalar_lea.vmem %s0, %s176
        %p178 = pneg %p60
        %p179 = pneg %p57
        %s180 = sadd.s32 %s21, %s23
        %s181 = smul.u32 32, %s180
        %p182 = scmp.lt.s32.totalorder %s181, 31
        %s183 = scalar_select %p182, %s181, 31
        %s184 = smul.addr %s183, 8
        %s185 = scalar_lea.vmem %s1, %s184
        %p186 = pneg %p88
        %p187 = pneg %p85
        %p188 = pneg %p116
        %p189 = pneg %p113
        %s190 = sand.u32 %s103, 1
        %s191 = scalar_lea.sflag [#allocation4], %s190
        %s192 = sand.u32 %s103, 1
        %s193 = smul.addr %s192, 4
        %s194 = scalar_lea.vmem [#allocation3], %s193
        %s195 = sadd.s32 %s21, %s23
        %s196 = smul.u32 2, %s195
        %p197 = scmp.lt.s32.totalorder %s22, 1
        %s198 = scalar_select %p197, %s22, 1
        %p199 = scmp.lt.s32.totalorder %s196, 1
        %s200 = scalar_select %p199, %s196, 1
        %s201 = smul.addr %s198, 2
        %s202 = sadd.s32 %s200, %s201
        %s203 = smul.addr %s202, 4
        %s204 = scalar_lea.vmem %s0, %s203
        %s205 = sadd.s32 %s21, %s23
        %s206 = smul.u32 2, %s205
        %s207 = sadd.s32 %s21, %s23
        %s208 = smul.u32 32, %s207
        %p209 = scmp.lt.s32.totalorder %s208, 31
        %s210 = scalar_select %p209, %s208, 31
        %s211 = smul.addr %s210, 8
        %s212 = scalar_lea.vmem %s1, %s211
        %s213 = sadd.s32 %s21, %s23
        %s214 = smul.u32 32, %s213
        %p215 = scmp.eq.s32.totalorder %s23, 0
        // Predicated region
        $region29: #{tpu_custom_call.1} parent=27 // pred_check
          %p216 = pneg %p215
        $region30: #{tpu_custom_call.1} parent=27 // pred_check_branch
          %218 = sbr.rel (%p216) target = $region32
        $region31: #{tpu_custom_call.1} parent=27 // pred_region
          %vm219 = vcmask 453632
          %220 = vst.msk [vmem:[#allocation2] sm:$0xf] %vm219, 0.0
        $region32: #{tpu_custom_call.1} parent=27 // pred_fallthru
          _
        %v221 = vld [vmem:[#allocation2] sm:$0xf]
        %v222 = vld [vmem:[%s204] sm:$0xff]
        %v223 = vld [vmem:[%s212] sm:$0xff]
        %v224 = vld [vmem:[%s212 + $0x8] sm:$0xff]
        %v225 = vld [vmem:[%s212 + $0x10] sm:$0xff]
        %v226 = vld [vmem:[%s212 + $0x18] sm:$0xff]
        %v227 = vld [vmem:[%s212 + $0x20] sm:$0xff]
        %v228 = vld [vmem:[%s212 + $0x28] sm:$0xff]
        %v229 = vld [vmem:[%s212 + $0x30] sm:$0xff]
        %v230 = vld [vmem:[%s212 + $0x38] sm:$0xff]
        %v231 = vld [vmem:[%s212 + $0x40] sm:$0xff]
        %v232 = vld [vmem:[%s212 + $0x48] sm:$0xff]
        %v233 = vld [vmem:[%s212 + $0x50] sm:$0xff]
        %v234 = vld [vmem:[%s212 + $0x58] sm:$0xff]
        %v235 = vld [vmem:[%s212 + $0x60] sm:$0xff]
        %v236 = vld [vmem:[%s212 + $0x68] sm:$0xff]
        %v237 = vld [vmem:[%s212 + $0x70] sm:$0xff]
        %v238 = vld [vmem:[%s212 + $0x78] sm:$0xff]
        %v239 = vld [vmem:[%s212 + $0x80] sm:$0xff]
        %v240 = vld [vmem:[%s212 + $0x88] sm:$0xff]
        %v241 = vld [vmem:[%s212 + $0x90] sm:$0xff]
        %v242 = vld [vmem:[%s212 + $0x98] sm:$0xff]
        %v243 = vld [vmem:[%s212 + $0xa0] sm:$0xff]
        %v244 = vld [vmem:[%s212 + $0xa8] sm:$0xff]
        %v245 = vld [vmem:[%s212 + $0xb0] sm:$0xff]
        %v246 = vld [vmem:[%s212 + $0xb8] sm:$0xff]
        %v247 = vld [vmem:[%s212 + $0xc0] sm:$0xff]
        %v248 = vld [vmem:[%s212 + $0xc8] sm:$0xff]
        %v249 = vld [vmem:[%s212 + $0xd0] sm:$0xff]
        %v250 = vld [vmem:[%s212 + $0xd8] sm:$0xff]
        %v251 = vld [vmem:[%s212 + $0xe0] sm:$0xff]
        %v252 = vld [vmem:[%s212 + $0xe8] sm:$0xff]
        %v253 = vld [vmem:[%s212 + $0xf0] sm:$0xff]
        %v254 = vld [vmem:[%s212 + $0xf8] sm:$0xff]
        %256 = vst [vmem:[#allocation1] ss:$2 sm:$0xff] %v222
        %v257 = vld.sshfl [vmem:[#allocation1] sm:$0xff pattern:$0x75316420]
        %v258 = vld.sshfl [vmem:[#allocation1 + $0x8] sm:$0xff pattern:$0x75316420]
        %261 = vmatpush.msra.mxu0 %v238
        %262 = vmatpush.msra.mxu0 %v237
        %263 = vmatpush.msra.mxu0 %v236
        %264 = vmatpush.msra.mxu0 %v235
        %265 = vmatpush.msra.mxu0 %v234
        %266 = vmatpush.msra.mxu0 %v233
        %267 = vmatpush.msra.mxu0 %v232
        %268 = vmatpush.msra.mxu0 %v231
        %269 = vmatpush.msra.mxu0 %v230
        %270 = vmatpush.msra.mxu0 %v229
        %271 = vmatpush.msra.mxu0 %v228
        %272 = vmatpush.msra.mxu0 %v227
        %273 = vmatpush.msra.mxu0 %v226
        %274 = vmatpush.msra.mxu0 %v225
        %275 = vmatpush.msra.mxu0 %v224
        %276 = vmatpush.msra.mxu0 %v223
        %277 = vmatmul.f32.gmra.mxu0 %v257
        %v278 = vpop.f32.mrf.mxu0
        %v279 = vadd.f32 0.0, %v278
        %280 = vdwg.mxu0
        %281 = vmatpush.msra.mxu0 %v254
        %282 = vmatpush.msra.mxu0 %v253
        %283 = vmatpush.msra.mxu0 %v252
        %284 = vmatpush.msra.mxu0 %v251
        %285 = vmatpush.msra.mxu0 %v250
        %286 = vmatpush.msra.mxu0 %v249
        %287 = vmatpush.msra.mxu0 %v248
        %288 = vmatpush.msra.mxu0 %v247
        %289 = vmatpush.msra.mxu0 %v246
        %290 = vmatpush.msra.mxu0 %v245
        %291 = vmatpush.msra.mxu0 %v244
        %292 = vmatpush.msra.mxu0 %v243
        %293 = vmatpush.msra.mxu0 %v242
        %294 = vmatpush.msra.mxu0 %v241
        %295 = vmatpush.msra.mxu0 %v240
        %296 = vmatpush.msra.mxu0 %v239
        %297 = vmatmul.f32.gmra.mxu0 %v258
        %v298 = vpop.f32.mrf.mxu0
        %v299 = vadd.f32 %v279, %v298
        %300 = vdwg.mxu0
        %v301 = vadd.f32 %v221, %v299
        %vm302 = vcmask 453632
        %303 = vst.msk [vmem:[#allocation2] sm:$0xf] %vm302, %v301
        // Predicated region
        $region33: #{tpu_custom_call.1} parent=27 // pred_check
          %p304 = pneg %p215
        $region34: #{tpu_custom_call.1} parent=27 // pred_check_branch
          %306 = sbr.rel (%p304) target = $region36
        $region35: #{tpu_custom_call.1} parent=27 // pred_region
          %v307 = vld [vmem:[#allocation2] sm:$0xf]
          %308 = vst.msk [vmem:[%s194] sm:$0xf] %vm302, %v307
        $region36: #{tpu_custom_call.1} parent=27 // pred_fallthru
          _
        %s309 = sand.u32 %s103, 1
        %s310 = scalar_lea.sflag [#allocation4], %s309
        %s311 = sand.u32 %s103, 1
        %s312 = smul.addr %s311, 4
        %s313 = scalar_lea.vmem [#allocation3], %s312
        // Predicated region
        $region37: #{tpu_custom_call.1} parent=27 // pred_check
          %p314 = pneg %p113
        $region38: #{tpu_custom_call.1} parent=27 // pred_check_branch
          %316 = sbr.rel (%p314) target = $region40
        $region39: #{tpu_custom_call.1} parent=27 // pred_region
          %318 = vsyncadd %s310, 0
          %s319 = smul.addr %s21, 2
          %s320 = sadd.s32 %s22, %s319
          %s321 = smul.addr %s320, 4
          %s322 = scalar_lea.hbm %s2, %s321
          %s324 = sshll.u32 %s313, 4
          %s325 = int_to_ptr.vmem [resolvable:$true] %s324
          %s326 = sshll.u32 %s322, 4
          %s327 = int_to_ptr.hbm [resolvable:$true] %s326
          %329 = dma.vmem_to_hbm [thread:$0]  %s325, 64, %s327, %s310
        $region40: #{tpu_custom_call.1} parent=27 // pred_fallthru
          _
      $region28: #{tpu_custom_call.1} parent=5 // pred_fallthru
        _
      %p330 = scmp.le.s32.totalorder 2, %s11
      // Predicated region
      $region41: #{tpu_custom_call.1} parent=5 // pred_check
        %p331 = pneg %p330
      $region42: #{tpu_custom_call.1} parent=5 // pred_check_branch
        %333 = sbr.rel (%p331) target = $region44
      $region43: #{tpu_custom_call.1} parent=5 // pred_region
        %s334 = ssub.s32 %s11, 2
        // Predicated region
        $region45: #{tpu_custom_call.1} parent=43 // pred_check
          %p335 = pneg %p119
        $region46: #{tpu_custom_call.1} parent=43 // pred_check_branch
          %337 = sbr.rel (%p335) target = $region48
        $region47: #{tpu_custom_call.1} parent=43 // pred_region
          %s338 = sand.u32 %s104, 1
          %s339 = scalar_lea.sflag [#allocation4], %s338
          %s340 = sand.u32 %s104, 1
          %s341 = smul.addr %s340, 4
          %s342 = scalar_lea.vmem [#allocation3], %s341
          %344 = dma.done %s339, 64
        $region48: #{tpu_custom_call.1} parent=43 // pred_fallthru
          _
      $region44: #{tpu_custom_call.1} parent=5 // pred_fallthru
        _
    $region6: #{tpu_custom_call.1} parent=1 // loop_footer
      %s15 = sadd.s32 1, %s11
    $region7: #{tpu_custom_call.1} parent=1 // loop_footer_branch
      %10 = sbr.rel target = $region3
    $region8: #{tpu_custom_call.1} parent=1 // loop_exit
      _
    %345 = vsyncpa [#allocation4], 1
    %s346 = scalar_lea.sflag [#allocation4], 1
    %347 = vsyncpa %s346, 1

</llo_original>
